<compile_context>
chip_gen: v5e
topology: v5e:2x2
jax: 0.10.0
libtpu: 0.0.40
codegen_flags: <defaults>
</compile_context>

<pallas_src>
import functools

import jax
import jax.numpy as jnp
from jax import lax
from jax.experimental import pallas as pl
from jax.experimental.pallas import tpu as pltpu


def _round_up(x, m):
    return ((x + m - 1) // m) * m


# ------------------------------ Pallas kernel -------------------------------

def _ffm_fused_kernel(x_ref, wk_ref, bcb_ref, w1_ref, b1_ref, w2_ref, b2_ref,
                      out_ref, *, H, W):
    """One image: 3x3 conv (+folded BN) + ReLU + squeeze-excite gate."""
    HW = H * W
    Cout = out_ref.shape[1]

    # Output-pixel column index, used to mask the left/right border taps that
    # the flat-shift im2col would otherwise wrap to the adjacent row.
    col = lax.broadcasted_iota(jnp.int32, (1, HW), 1) % W

    # ---- implicit im2col: 9 statically shifted loads + small dots ----
    acc = jnp.zeros((Cout, HW), jnp.float32)
    for kh in range(3):
        for kw in range(3):
            o = kh * W + kw                          # static flat offset
            s = x_ref[0, :, o:o + HW]                # (Cin_p, HW) shifted window
            if kw == 0:                              # tap dw=-1 invalid at w == 0
                s = jnp.where(col != 0, s, 0.0)
            elif kw == 2:                            # tap dw=+1 invalid at w == W-1
                s = jnp.where(col != W - 1, s, 0.0)
            acc = acc + jnp.dot(wk_ref[kh * 3 + kw], s,
                                preferred_element_type=jnp.float32)

    feather = jnp.maximum(acc + bcb_ref[...], 0.0)   # folded conv-bias/BN + ReLU

    # ---- squeeze-excite while feather is resident in VMEM ----
    # Channel vectors are kept column-major (Cout, .); the tiny matvecs run at
    # lane width 128 (replicated columns) for a clean MXU shape.
    pooled = jnp.sum(feather, axis=1, keepdims=True) * (1.0 / HW)     # (Cout, 1)
    pooled_b = jnp.broadcast_to(pooled, (Cout, 128))
    h = jnp.maximum(
        jnp.dot(w1_ref[...], pooled_b, preferred_element_type=jnp.float32)
        + b1_ref[...], 0.0)
    z = jnp.dot(w2_ref[...], h, preferred_element_type=jnp.float32) + b2_ref[...]
    se = 1.0 / (1.0 + jnp.exp(-z))                   # sigmoid (EUP)
    gate = 1.0 + se[:, 0:1]                          # (Cout, 1)

    out_ref[0] = feather * gate                      # = feather + feather*sigmoid


# ------------------------------- parameters ---------------------------------

def init_params(key, cin, cout):
    ks = jax.random.split(key, 10)
    eps = 1e-5
    wc = jax.random.normal(ks[0], (3, 3, cin, cout), jnp.float32) * 0.1   # HWIO
    bc = jax.random.normal(ks[1], (1, cout), jnp.float32) * 0.1
    gamma = 1.0 + 0.1 * jax.random.normal(ks[2], (1, cout), jnp.float32)
    beta = 0.1 * jax.random.normal(ks[3], (1, cout), jnp.float32)
    run_mean = 0.1 * jax.random.normal(ks[4], (1, cout), jnp.float32)
    run_var = 1.0 + 0.1 * jnp.abs(jax.random.normal(ks[5], (1, cout), jnp.float32))
    bns = gamma / jnp.sqrt(run_var + eps)
    bnb = beta - run_mean * bns
    # 1x1 conv weights stored as (C_in, C_out) (i.e. torch weight[:, :, 0, 0].T)
    w1 = jax.random.normal(ks[6], (cout, cout), jnp.float32) * 0.1
    b1 = jax.random.normal(ks[7], (1, cout), jnp.float32) * 0.1
    w2 = jax.random.normal(ks[8], (cout, cout), jnp.float32) * 0.1
    b2 = jax.random.normal(ks[9], (1, cout), jnp.float32) * 0.1
    return dict(wc=wc, bc=bc, bns=bns, bnb=bnb, w1=w1, b1=b1, w2=w2, b2=b2)


# ------------------------------ forward pass ---------------------------------

@jax.jit
def ffm_forward(sp, cx, params):
    N, Cin, H, W = sp.shape
    Cout = params["w1"].shape[0]
    HW = H * W
    Cin_p = _round_up(Cin, 8)                 # sublane-pad the contraction dim
    base = W + 1                              # flat offset of pixel (0, 0)
    Lpad = _round_up(HW + 2 * W + 2, 128)     # covers every 3x3 tap offset

    # ---- fold 0.5 averaging + eval-mode BN into conv weight / bias ----
    bns = params["bns"].reshape(Cout, 1)
    bnb = params["bnb"].reshape(Cout, 1)
    wk = jnp.transpose(params["wc"].reshape(9, Cin, Cout), (0, 2, 1))  # (9,Cout,Cin)
    wk = wk * (0.5 * bns)[None]
    wk_p = jnp.zeros((9, Cout, Cin_p), jnp.float32).at[:, :, :Cin].set(wk)
    bcb = params["bc"].reshape(Cout, 1) * bns + bnb

    # channel-major (output-major) 1x1-conv weights for the SE MLP
    w1c = params["w1"].T
    b1c = params["b1"].reshape(Cout, 1)
    w2c = params["w2"].T
    b2c = params["b2"].reshape(Cout, 1)

    # ---- single flat, zero-padded image per (n, channel): read once ----
    x = (sp + cx).reshape(N, Cin, HW)          # the /2 is folded into wk
    xpf = jnp.zeros((N, Cin_p, Lpad), jnp.float32)
    xpf = xpf.at[:, :Cin, base:base + HW].set(x)

    kernel = functools.partial(_ffm_fused_kernel, H=H, W=W)
    out = pl.pallas_call(
        kernel,
        out_shape=jax.ShapeDtypeStruct((N, Cout, HW), jnp.float32),
        grid=(N,),
        in_specs=[
            pl.BlockSpec((1, Cin_p, Lpad), lambda b: (b, 0, 0)),
            pl.BlockSpec((9, Cout, Cin_p), lambda b: (0, 0, 0)),
            pl.BlockSpec((Cout, 1), lambda b: (0, 0)),
            pl.BlockSpec((Cout, Cout), lambda b: (0, 0)),
            pl.BlockSpec((Cout, 1), lambda b: (0, 0)),
            pl.BlockSpec((Cout, Cout), lambda b: (0, 0)),
            pl.BlockSpec((Cout, 1), lambda b: (0, 0)),
        ],
        out_specs=pl.BlockSpec((1, Cout, HW), lambda b: (b, 0, 0)),
        compiler_params=pltpu.CompilerParams(
            dimension_semantics=("parallel",)),
        cost_estimate=pl.CostEstimate(
            flops=2 * N * 9 * Cout * Cin_p * HW + 2 * N * 2 * Cout * Cout * 128,
            transcendentals=N * Cout * 128,
            bytes_accessed=4 * (N * Cin_p * Lpad + N * Cout * HW
                                + 9 * Cout * Cin_p + 2 * Cout * Cout + 3 * Cout)),
    )(xpf, wk_p, bcb, w1c, b1c, w2c, b2c)

    # Output is already channel-major (N, Cout, H*W): NCHW via a free reshape.
    return out.reshape(N, Cout, H, W)


# ------------------------------ JAX reference --------------------------------

def ffm_reference(sp, cx, params):
    """Pure-JAX reference with identical semantics (for correctness check)."""
    x = (sp + cx) * 0.5
    x = jnp.transpose(x, (0, 2, 3, 1))                         # NHWC
    conv = lax.conv_general_dilated(
        x, params["wc"], window_strides=(1, 1), padding="SAME",
        dimension_numbers=("NHWC", "HWIO", "NHWC")) + params["bc"]
    feather = jnp.maximum(conv * params["bns"] + params["bnb"], 0.0)
    pooled = feather.mean(axis=(1, 2))
    h = jnp.maximum(pooled @ params["w1"] + params["b1"], 0.0)
    s = jax.nn.sigmoid(h @ params["w2"] + params["b2"])
    out = feather * (1.0 + s[:, None, None, :])
    return jnp.transpose(out, (0, 3, 1, 2))


if __name__ == "__main__":
    key = jax.random.PRNGKey(0)
    k_sp, k_cx, k_par = jax.random.split(key, 3)

    N, Cin, H, W = 2, 4, 16, 16
    Cout = 8

    sp = jax.random.normal(k_sp, (N, Cin, H, W), jnp.float32)
    cx = jax.random.normal(k_cx, (N, Cin, H, W), jnp.float32)
    params = init_params(k_par, Cin, Cout)

    out = jax.block_until_ready(ffm_forward(sp, cx, params))
    ref = jax.block_until_ready(ffm_reference(sp, cx, params))

    assert out.shape == (N, Cout, H, W), out.shape
    assert bool(jnp.allclose(out, ref, rtol=1e-3, atol=1e-3)), "mismatch vs reference"
    print("KERNEL_OK")
</pallas_src>

<mosaic_0001>
module attributes {stable_mosaic.version = 11 : i64} {
  func.func @_ffm_fused_kernel(%arg0: i32, %arg1: memref<1x8x384xf32, #tpu.memory_space<vmem>>, %arg2: memref<9x8x8xf32, #tpu.memory_space<vmem>>, %arg3: memref<8x1xf32, #tpu.memory_space<vmem>>, %arg4: memref<8x8xf32, #tpu.memory_space<vmem>>, %arg5: memref<8x1xf32, #tpu.memory_space<vmem>>, %arg6: memref<8x8xf32, #tpu.memory_space<vmem>>, %arg7: memref<8x1xf32, #tpu.memory_space<vmem>>, %arg8: memref<1x8x256xf32, #tpu.memory_space<vmem>>) attributes {dimension_semantics = [#tpu.dimension_semantics<parallel>], iteration_bounds = array<i64: 2>, scalar_prefetch = 0 : i64, scratch_operands = 0 : i64, tpu.core_type = #tpu.core_type<tc>, window_params = [{transform_indices = @transform_0, window_bounds = array<i64: 1, 8, 384>}, {pipeline_mode = #tpu.pipeline_mode<synchronous>, transform_indices = @transform_1, window_bounds = array<i64: 9, 8, 8>}, {pipeline_mode = #tpu.pipeline_mode<synchronous>, transform_indices = @transform_2, window_bounds = array<i64: 8, 1>}, {pipeline_mode = #tpu.pipeline_mode<synchronous>, transform_indices = @transform_3, window_bounds = array<i64: 8, 8>}, {pipeline_mode = #tpu.pipeline_mode<synchronous>, transform_indices = @transform_4, window_bounds = array<i64: 8, 1>}, {pipeline_mode = #tpu.pipeline_mode<synchronous>, transform_indices = @transform_5, window_bounds = array<i64: 8, 8>}, {pipeline_mode = #tpu.pipeline_mode<synchronous>, transform_indices = @transform_6, window_bounds = array<i64: 8, 1>}, {transform_indices = @transform_7, window_bounds = array<i64: 1, 8, 256>}]} {
    %0 = tpu.iota {dimensions = array<i32: 1>} : vector<1x256xi32>
    %c16_i32 = arith.constant 16 : i32
    %c0_i32 = arith.constant 0 : i32
    %1 = arith.cmpi eq, %c16_i32, %c0_i32 : i32
    %c1_i32 = arith.constant 1 : i32
    %2 = arith.select %1, %c1_i32, %c16_i32 : i32
    %3 = vector.broadcast %2 : i32 to vector<1x256xi32>
    %4 = arith.remsi %0, %3 : vector<1x256xi32>
    %c0_i32_0 = arith.constant 0 : i32
    %5 = vector.broadcast %c0_i32_0 : i32 to vector<1x256xi32>
    %6 = arith.cmpi ne, %4, %5 : vector<1x256xi32>
    %c0_i32_1 = arith.constant 0 : i32
    %7 = vector.broadcast %c0_i32_1 : i32 to vector<1x256xi32>
    %8 = arith.cmpi slt, %4, %7 : vector<1x256xi32>
    %c0_i32_2 = arith.constant 0 : i32
    %9 = arith.cmpi slt, %2, %c0_i32_2 : i32
    %10 = vector.broadcast %9 : i1 to vector<1x256xi1>
    %11 = vector.broadcast %10 : vector<1x256xi1> to vector<1x256xi1>
    %12 = arith.xori %8, %11 : vector<1x256xi1>
    %13 = arith.andi %12, %6 : vector<1x256xi1>
    %14 = vector.broadcast %2 : i32 to vector<1x256xi32>
    %15 = arith.addi %4, %14 : vector<1x256xi32>
    %16 = arith.select %13, %15, %4 : vector<1x256xi1>, vector<1x256xi32>
    %cst = arith.constant 0.000000e+00 : f32
    %17 = vector.broadcast %cst : f32 to vector<8x256xf32>
    %c0 = arith.constant 0 : index
    %c0_3 = arith.constant 0 : index
    %c0_4 = arith.constant 0 : index
    %18 = vector.load %arg1[%c0, %c0_3, %c0_4] : memref<1x8x384xf32, #tpu.memory_space<vmem>>, vector<1x8x256xf32>
    %19 = vector.shape_cast %18 : vector<1x8x256xf32> to vector<8x256xf32>
    %c0_i32_5 = arith.constant 0 : i32
    %20 = vector.broadcast %c0_i32_5 : i32 to vector<1x256xi32>
    %21 = arith.cmpi ne, %16, %20 : vector<1x256xi32>
    %cst_6 = arith.constant 0.000000e+00 : f32
    %22 = vector.shape_cast %21 : vector<1x256xi1> to vector<1x256xi1>
    %23 = vector.broadcast %22 : vector<1x256xi1> to vector<8x256xi1>
    %24 = vector.broadcast %cst_6 : f32 to vector<8x256xf32>
    %25 = arith.select %23, %19, %24 : vector<8x256xi1>, vector<8x256xf32>
    %c0_7 = arith.constant 0 : index
    %c0_8 = arith.constant 0 : index
    %c0_9 = arith.constant 0 : index
    %26 = vector.load %arg2[%c0_7, %c0_8, %c0_9] : memref<9x8x8xf32, #tpu.memory_space<vmem>>, vector<1x8x8xf32>
    %27 = vector.shape_cast %26 : vector<1x8x8xf32> to vector<8x8xf32>
    %cst_10 = arith.constant dense<0.000000e+00> : vector<8x256xf32>
    %28 = tpu.matmul %27, %25, %cst_10 {dimension_numbers = #tpu.dot_dimension_numbers<[1], [0], [0], [1], [0, 0, 1, 1], [], []>} : vector<8x8xf32>, vector<8x256xf32>, vector<8x256xf32> -> vector<8x256xf32>
    %29 = arith.addf %17, %28 : vector<8x256xf32>
    %c0_11 = arith.constant 0 : index
    %c0_12 = arith.constant 0 : index
    %c1 = arith.constant 1 : index
    %30 = vector.load %arg1[%c0_11, %c0_12, %c1] : memref<1x8x384xf32, #tpu.memory_space<vmem>>, vector<1x8x256xf32>
    %31 = vector.shape_cast %30 : vector<1x8x256xf32> to vector<8x256xf32>
    %c1_13 = arith.constant 1 : index
    %c0_14 = arith.constant 0 : index
    %c0_15 = arith.constant 0 : index
    %32 = vector.load %arg2[%c1_13, %c0_14, %c0_15] : memref<9x8x8xf32, #tpu.memory_space<vmem>>, vector<1x8x8xf32>
    %33 = vector.shape_cast %32 : vector<1x8x8xf32> to vector<8x8xf32>
    %cst_16 = arith.constant dense<0.000000e+00> : vector<8x256xf32>
    %34 = tpu.matmul %33, %31, %cst_16 {dimension_numbers = #tpu.dot_dimension_numbers<[1], [0], [0], [1], [0, 0, 1, 1], [], []>} : vector<8x8xf32>, vector<8x256xf32>, vector<8x256xf32> -> vector<8x256xf32>
    %35 = arith.addf %29, %34 : vector<8x256xf32>
    %c0_17 = arith.constant 0 : index
    %c0_18 = arith.constant 0 : index
    %c2 = arith.constant 2 : index
    %36 = vector.load %arg1[%c0_17, %c0_18, %c2] : memref<1x8x384xf32, #tpu.memory_space<vmem>>, vector<1x8x256xf32>
    %37 = vector.shape_cast %36 : vector<1x8x256xf32> to vector<8x256xf32>
    %c15_i32 = arith.constant 15 : i32
    %38 = vector.broadcast %c15_i32 : i32 to vector<1x256xi32>
    %39 = arith.cmpi ne, %16, %38 : vector<1x256xi32>
    %cst_19 = arith.constant 0.000000e+00 : f32
    %40 = vector.shape_cast %39 : vector<1x256xi1> to vector<1x256xi1>
    %41 = vector.broadcast %40 : vector<1x256xi1> to vector<8x256xi1>
    %42 = vector.broadcast %cst_19 : f32 to vector<8x256xf32>
    %43 = arith.select %41, %37, %42 : vector<8x256xi1>, vector<8x256xf32>
    %c2_20 = arith.constant 2 : index
    %c0_21 = arith.constant 0 : index
    %c0_22 = arith.constant 0 : index
    %44 = vector.load %arg2[%c2_20, %c0_21, %c0_22] : memref<9x8x8xf32, #tpu.memory_space<vmem>>, vector<1x8x8xf32>
    %45 = vector.shape_cast %44 : vector<1x8x8xf32> to vector<8x8xf32>
    %cst_23 = arith.constant dense<0.000000e+00> : vector<8x256xf32>
    %46 = tpu.matmul %45, %43, %cst_23 {dimension_numbers = #tpu.dot_dimension_numbers<[1], [0], [0], [1], [0, 0, 1, 1], [], []>} : vector<8x8xf32>, vector<8x256xf32>, vector<8x256xf32> -> vector<8x256xf32>
    %47 = arith.addf %35, %46 : vector<8x256xf32>
    %c0_24 = arith.constant 0 : index
    %c0_25 = arith.constant 0 : index
    %c16 = arith.constant 16 : index
    %48 = vector.load %arg1[%c0_24, %c0_25, %c16] : memref<1x8x384xf32, #tpu.memory_space<vmem>>, vector<1x8x256xf32>
    %49 = vector.shape_cast %48 : vector<1x8x256xf32> to vector<8x256xf32>
    %c0_i32_26 = arith.constant 0 : i32
    %50 = vector.broadcast %c0_i32_26 : i32 to vector<1x256xi32>
    %51 = arith.cmpi ne, %16, %50 : vector<1x256xi32>
    %cst_27 = arith.constant 0.000000e+00 : f32
    %52 = vector.shape_cast %51 : vector<1x256xi1> to vector<1x256xi1>
    %53 = vector.broadcast %52 : vector<1x256xi1> to vector<8x256xi1>
    %54 = vector.broadcast %cst_27 : f32 to vector<8x256xf32>
    %55 = arith.select %53, %49, %54 : vector<8x256xi1>, vector<8x256xf32>
    %c3 = arith.constant 3 : index
    %c0_28 = arith.constant 0 : index
    %c0_29 = arith.constant 0 : index
    %56 = vector.load %arg2[%c3, %c0_28, %c0_29] : memref<9x8x8xf32, #tpu.memory_space<vmem>>, vector<1x8x8xf32>
    %57 = vector.shape_cast %56 : vector<1x8x8xf32> to vector<8x8xf32>
    %cst_30 = arith.constant dense<0.000000e+00> : vector<8x256xf32>
    %58 = tpu.matmul %57, %55, %cst_30 {dimension_numbers = #tpu.dot_dimension_numbers<[1], [0], [0], [1], [0, 0, 1, 1], [], []>} : vector<8x8xf32>, vector<8x256xf32>, vector<8x256xf32> -> vector<8x256xf32>
    %59 = arith.addf %47, %58 : vector<8x256xf32>
    %c0_31 = arith.constant 0 : index
    %c0_32 = arith.constant 0 : index
    %c17 = arith.constant 17 : index
    %60 = vector.load %arg1[%c0_31, %c0_32, %c17] : memref<1x8x384xf32, #tpu.memory_space<vmem>>, vector<1x8x256xf32>
    %61 = vector.shape_cast %60 : vector<1x8x256xf32> to vector<8x256xf32>
    %c4 = arith.constant 4 : index
    %c0_33 = arith.constant 0 : index
    %c0_34 = arith.constant 0 : index
    %62 = vector.load %arg2[%c4, %c0_33, %c0_34] : memref<9x8x8xf32, #tpu.memory_space<vmem>>, vector<1x8x8xf32>
    %63 = vector.shape_cast %62 : vector<1x8x8xf32> to vector<8x8xf32>
    %cst_35 = arith.constant dense<0.000000e+00> : vector<8x256xf32>
    %64 = tpu.matmul %63, %61, %cst_35 {dimension_numbers = #tpu.dot_dimension_numbers<[1], [0], [0], [1], [0, 0, 1, 1], [], []>} : vector<8x8xf32>, vector<8x256xf32>, vector<8x256xf32> -> vector<8x256xf32>
    %65 = arith.addf %59, %64 : vector<8x256xf32>
    %c0_36 = arith.constant 0 : index
    %c0_37 = arith.constant 0 : index
    %c18 = arith.constant 18 : index
    %66 = vector.load %arg1[%c0_36, %c0_37, %c18] : memref<1x8x384xf32, #tpu.memory_space<vmem>>, vector<1x8x256xf32>
    %67 = vector.shape_cast %66 : vector<1x8x256xf32> to vector<8x256xf32>
    %c15_i32_38 = arith.constant 15 : i32
    %68 = vector.broadcast %c15_i32_38 : i32 to vector<1x256xi32>
    %69 = arith.cmpi ne, %16, %68 : vector<1x256xi32>
    %cst_39 = arith.constant 0.000000e+00 : f32
    %70 = vector.shape_cast %69 : vector<1x256xi1> to vector<1x256xi1>
    %71 = vector.broadcast %70 : vector<1x256xi1> to vector<8x256xi1>
    %72 = vector.broadcast %cst_39 : f32 to vector<8x256xf32>
    %73 = arith.select %71, %67, %72 : vector<8x256xi1>, vector<8x256xf32>
    %c5 = arith.constant 5 : index
    %c0_40 = arith.constant 0 : index
    %c0_41 = arith.constant 0 : index
    %74 = vector.load %arg2[%c5, %c0_40, %c0_41] : memref<9x8x8xf32, #tpu.memory_space<vmem>>, vector<1x8x8xf32>
    %75 = vector.shape_cast %74 : vector<1x8x8xf32> to vector<8x8xf32>
    %cst_42 = arith.constant dense<0.000000e+00> : vector<8x256xf32>
    %76 = tpu.matmul %75, %73, %cst_42 {dimension_numbers = #tpu.dot_dimension_numbers<[1], [0], [0], [1], [0, 0, 1, 1], [], []>} : vector<8x8xf32>, vector<8x256xf32>, vector<8x256xf32> -> vector<8x256xf32>
    %77 = arith.addf %65, %76 : vector<8x256xf32>
    %c0_43 = arith.constant 0 : index
    %c0_44 = arith.constant 0 : index
    %c32 = arith.constant 32 : index
    %78 = vector.load %arg1[%c0_43, %c0_44, %c32] : memref<1x8x384xf32, #tpu.memory_space<vmem>>, vector<1x8x256xf32>
    %79 = vector.shape_cast %78 : vector<1x8x256xf32> to vector<8x256xf32>
    %c0_i32_45 = arith.constant 0 : i32
    %80 = vector.broadcast %c0_i32_45 : i32 to vector<1x256xi32>
    %81 = arith.cmpi ne, %16, %80 : vector<1x256xi32>
    %cst_46 = arith.constant 0.000000e+00 : f32
    %82 = vector.shape_cast %81 : vector<1x256xi1> to vector<1x256xi1>
    %83 = vector.broadcast %82 : vector<1x256xi1> to vector<8x256xi1>
    %84 = vector.broadcast %cst_46 : f32 to vector<8x256xf32>
    %85 = arith.select %83, %79, %84 : vector<8x256xi1>, vector<8x256xf32>
    %c6 = arith.constant 6 : index
    %c0_47 = arith.constant 0 : index
    %c0_48 = arith.constant 0 : index
    %86 = vector.load %arg2[%c6, %c0_47, %c0_48] : memref<9x8x8xf32, #tpu.memory_space<vmem>>, vector<1x8x8xf32>
    %87 = vector.shape_cast %86 : vector<1x8x8xf32> to vector<8x8xf32>
    %cst_49 = arith.constant dense<0.000000e+00> : vector<8x256xf32>
    %88 = tpu.matmul %87, %85, %cst_49 {dimension_numbers = #tpu.dot_dimension_numbers<[1], [0], [0], [1], [0, 0, 1, 1], [], []>} : vector<8x8xf32>, vector<8x256xf32>, vector<8x256xf32> -> vector<8x256xf32>
    %89 = arith.addf %77, %88 : vector<8x256xf32>
    %c0_50 = arith.constant 0 : index
    %c0_51 = arith.constant 0 : index
    %c33 = arith.constant 33 : index
    %90 = vector.load %arg1[%c0_50, %c0_51, %c33] : memref<1x8x384xf32, #tpu.memory_space<vmem>>, vector<1x8x256xf32>
    %91 = vector.shape_cast %90 : vector<1x8x256xf32> to vector<8x256xf32>
    %c7 = arith.constant 7 : index
    %c0_52 = arith.constant 0 : index
    %c0_53 = arith.constant 0 : index
    %92 = vector.load %arg2[%c7, %c0_52, %c0_53] : memref<9x8x8xf32, #tpu.memory_space<vmem>>, vector<1x8x8xf32>
    %93 = vector.shape_cast %92 : vector<1x8x8xf32> to vector<8x8xf32>
    %cst_54 = arith.constant dense<0.000000e+00> : vector<8x256xf32>
    %94 = tpu.matmul %93, %91, %cst_54 {dimension_numbers = #tpu.dot_dimension_numbers<[1], [0], [0], [1], [0, 0, 1, 1], [], []>} : vector<8x8xf32>, vector<8x256xf32>, vector<8x256xf32> -> vector<8x256xf32>
    %95 = arith.addf %89, %94 : vector<8x256xf32>
    %c0_55 = arith.constant 0 : index
    %c0_56 = arith.constant 0 : index
    %c34 = arith.constant 34 : index
    %96 = vector.load %arg1[%c0_55, %c0_56, %c34] : memref<1x8x384xf32, #tpu.memory_space<vmem>>, vector<1x8x256xf32>
    %97 = vector.shape_cast %96 : vector<1x8x256xf32> to vector<8x256xf32>
    %c15_i32_57 = arith.constant 15 : i32
    %98 = vector.broadcast %c15_i32_57 : i32 to vector<1x256xi32>
    %99 = arith.cmpi ne, %16, %98 : vector<1x256xi32>
    %cst_58 = arith.constant 0.000000e+00 : f32
    %100 = vector.shape_cast %99 : vector<1x256xi1> to vector<1x256xi1>
    %101 = vector.broadcast %100 : vector<1x256xi1> to vector<8x256xi1>
    %102 = vector.broadcast %cst_58 : f32 to vector<8x256xf32>
    %103 = arith.select %101, %97, %102 : vector<8x256xi1>, vector<8x256xf32>
    %c8 = arith.constant 8 : index
    %c0_59 = arith.constant 0 : index
    %c0_60 = arith.constant 0 : index
    %104 = vector.load %arg2[%c8, %c0_59, %c0_60] : memref<9x8x8xf32, #tpu.memory_space<vmem>>, vector<1x8x8xf32>
    %105 = vector.shape_cast %104 : vector<1x8x8xf32> to vector<8x8xf32>
    %cst_61 = arith.constant dense<0.000000e+00> : vector<8x256xf32>
    %106 = tpu.matmul %105, %103, %cst_61 {dimension_numbers = #tpu.dot_dimension_numbers<[1], [0], [0], [1], [0, 0, 1, 1], [], []>} : vector<8x8xf32>, vector<8x256xf32>, vector<8x256xf32> -> vector<8x256xf32>
    %107 = arith.addf %95, %106 : vector<8x256xf32>
    %c0_62 = arith.constant 0 : index
    %c0_63 = arith.constant 0 : index
    %108 = vector.load %arg3[%c0_62, %c0_63] : memref<8x1xf32, #tpu.memory_space<vmem>>, vector<8x1xf32>
    %109 = vector.broadcast %108 : vector<8x1xf32> to vector<8x256xf32>
    %110 = arith.addf %107, %109 : vector<8x256xf32>
    %cst_64 = arith.constant 0.000000e+00 : f32
    %111 = vector.broadcast %cst_64 : f32 to vector<8x256xf32>
    %112 = arith.maximumf %110, %111 : vector<8x256xf32>
    %cst_65 = arith.constant dense<0.000000e+00> : vector<8xf32>
    %113 = vector.multi_reduction <add>, %112, %cst_65 [1] : vector<8x256xf32> to vector<8xf32>
    %114 = vector.shape_cast %113 : vector<8xf32> to vector<8x1xf32>
    %cst_66 = arith.constant 3.906250e-03 : f32
    %115 = vector.broadcast %cst_66 : f32 to vector<8x1xf32>
    %116 = arith.mulf %114, %115 : vector<8x1xf32>
    %117 = vector.shape_cast %116 : vector<8x1xf32> to vector<8x1xf32>
    %118 = vector.broadcast %117 : vector<8x1xf32> to vector<8x128xf32>
    %c0_67 = arith.constant 0 : index
    %c0_68 = arith.constant 0 : index
    %119 = vector.load %arg4[%c0_67, %c0_68] : memref<8x8xf32, #tpu.memory_space<vmem>>, vector<8x8xf32>
    %cst_69 = arith.constant dense<0.000000e+00> : vector<8x128xf32>
    %120 = tpu.matmul %119, %118, %cst_69 {dimension_numbers = #tpu.dot_dimension_numbers<[1], [0], [0], [1], [0, 0, 1, 1], [], []>} : vector<8x8xf32>, vector<8x128xf32>, vector<8x128xf32> -> vector<8x128xf32>
    %c0_70 = arith.constant 0 : index
    %c0_71 = arith.constant 0 : index
    %121 = vector.load %arg5[%c0_70, %c0_71] : memref<8x1xf32, #tpu.memory_space<vmem>>, vector<8x1xf32>
    %122 = vector.broadcast %121 : vector<8x1xf32> to vector<8x128xf32>
    %123 = arith.addf %120, %122 : vector<8x128xf32>
    %cst_72 = arith.constant 0.000000e+00 : f32
    %124 = vector.broadcast %cst_72 : f32 to vector<8x128xf32>
    %125 = arith.maximumf %123, %124 : vector<8x128xf32>
    %c0_73 = arith.constant 0 : index
    %c0_74 = arith.constant 0 : index
    %126 = vector.load %arg6[%c0_73, %c0_74] : memref<8x8xf32, #tpu.memory_space<vmem>>, vector<8x8xf32>
    %cst_75 = arith.constant dense<0.000000e+00> : vector<8x128xf32>
    %127 = tpu.matmul %126, %125, %cst_75 {dimension_numbers = #tpu.dot_dimension_numbers<[1], [0], [0], [1], [0, 0, 1, 1], [], []>} : vector<8x8xf32>, vector<8x128xf32>, vector<8x128xf32> -> vector<8x128xf32>
    %c0_76 = arith.constant 0 : index
    %c0_77 = arith.constant 0 : index
    %128 = vector.load %arg7[%c0_76, %c0_77] : memref<8x1xf32, #tpu.memory_space<vmem>>, vector<8x1xf32>
    %129 = vector.broadcast %128 : vector<8x1xf32> to vector<8x128xf32>
    %130 = arith.addf %127, %129 : vector<8x128xf32>
    %cst_78 = arith.constant 0.000000e+00 : f32
    %131 = vector.broadcast %cst_78 : f32 to vector<8x128xf32>
    %132 = arith.subf %131, %130 : vector<8x128xf32>
    %133 = math.exp %132 : vector<8x128xf32>
    %cst_79 = arith.constant 1.000000e+00 : f32
    %134 = vector.broadcast %cst_79 : f32 to vector<8x128xf32>
    %135 = arith.addf %134, %133 : vector<8x128xf32>
    %cst_80 = arith.constant 1.000000e+00 : f32
    %136 = vector.broadcast %cst_80 : f32 to vector<8x128xf32>
    %137 = arith.divf %136, %135 : vector<8x128xf32>
    %138 = vector.extract_strided_slice %137 {offsets = [0, 0], sizes = [8, 1], strides = [1, 1]} : vector<8x128xf32> to vector<8x1xf32>
    %cst_81 = arith.constant 1.000000e+00 : f32
    %139 = vector.broadcast %cst_81 : f32 to vector<8x1xf32>
    %140 = arith.addf %139, %138 : vector<8x1xf32>
    %141 = vector.broadcast %140 : vector<8x1xf32> to vector<8x256xf32>
    %142 = arith.mulf %112, %141 : vector<8x256xf32>
    %c0_82 = arith.constant 0 : index
    %c0_83 = arith.constant 0 : index
    %c0_84 = arith.constant 0 : index
    %143 = vector.load %arg8[%c0_82, %c0_83, %c0_84] : memref<1x8x256xf32, #tpu.memory_space<vmem>>, vector<1x8x256xf32>
    %144 = vector.shape_cast %143 : vector<1x8x256xf32> to vector<8x256xf32>
    %145 = vector.shape_cast %142 : vector<8x256xf32> to vector<1x8x256xf32>
    tpu.vector_store %arg8[%c0_82, %c0_83, %c0_84], %145 {strides = array<i32>} : memref<1x8x256xf32, #tpu.memory_space<vmem>>, vector<1x8x256xf32>,
    return
  }
  func.func @transform_0(%arg0: i32) -> (i32, i32, i32) {
    %c0_i32 = arith.constant 0 : i32
    %c0_i32_0 = arith.constant 0 : i32
    %c0_i32_1 = arith.constant 0 : i32
    return %arg0, %c0_i32, %c0_i32_0 : i32, i32, i32
  }
  func.func @transform_1(%arg0: i32) -> (i32, i32, i32) {
    %c0_i32 = arith.constant 0 : i32
    %c0_i32_0 = arith.constant 0 : i32
    %c0_i32_1 = arith.constant 0 : i32
    %c0_i32_2 = arith.constant 0 : i32
    return %c0_i32, %c0_i32_0, %c0_i32_1 : i32, i32, i32
  }
  func.func @transform_2(%arg0: i32) -> (i32, i32) {
    %c0_i32 = arith.constant 0 : i32
    %c0_i32_0 = arith.constant 0 : i32
    %c0_i32_1 = arith.constant 0 : i32
    return %c0_i32, %c0_i32_0 : i32, i32
  }
  func.func @transform_3(%arg0: i32) -> (i32, i32) {
    %c0_i32 = arith.constant 0 : i32
    %c0_i32_0 = arith.constant 0 : i32
    %c0_i32_1 = arith.constant 0 : i32
    return %c0_i32, %c0_i32_0 : i32, i32
  }
  func.func @transform_4(%arg0: i32) -> (i32, i32) {
    %c0_i32 = arith.constant 0 : i32
    %c0_i32_0 = arith.constant 0 : i32
    %c0_i32_1 = arith.constant 0 : i32
    return %c0_i32, %c0_i32_0 : i32, i32
  }
  func.func @transform_5(%arg0: i32) -> (i32, i32) {
    %c0_i32 = arith.constant 0 : i32
    %c0_i32_0 = arith.constant 0 : i32
    %c0_i32_1 = arith.constant 0 : i32
    return %c0_i32, %c0_i32_0 : i32, i32
  }
  func.func @transform_6(%arg0: i32) -> (i32, i32) {
    %c0_i32 = arith.constant 0 : i32
    %c0_i32_0 = arith.constant 0 : i32
    %c0_i32_1 = arith.constant 0 : i32
    return %c0_i32, %c0_i32_0 : i32, i32
  }
  func.func @transform_7(%arg0: i32) -> (i32, i32, i32) {
    %c0_i32 = arith.constant 0 : i32
    %c0_i32_0 = arith.constant 0 : i32
    %c0_i32_1 = arith.constant 0 : i32
    return %arg0, %c0_i32, %c0_i32_0 : i32, i32, i32
  }
}

</mosaic_0001>

<llo_original>
// kernel: ffm_forward.1
$region0: #{ffm_forward.1}
  #allocation0 [shape = 'u32[]', space=smem, size = 0x4, offset = 0x4, fixed_abs, tag = 'smem constant byte address 0x4 - core index']
  #allocation1 [shape = 'u32[72,128]{1,0:T(1,128)}', space=vmem, size = 0x9000, scoped, tag = 'internal scratch']
  %s0 = inlined_call_operand.vmem [shape: f32[2,8,384], index: 0, kind: input, shape index: {}]
  %s1 = inlined_call_operand.vmem [shape: f32[9,8,8], index: 1, kind: input, shape index: {}]
  %s2 = inlined_call_operand.vmem [shape: f32[8,1], index: 2, kind: input, shape index: {}]
  %s3 = inlined_call_operand.vmem [shape: f32[8,8], index: 3, kind: input, shape index: {}]
  %s4 = inlined_call_operand.vmem [shape: f32[8,1], index: 4, kind: input, shape index: {}]
  %s5 = inlined_call_operand.vmem [shape: f32[8,8], index: 5, kind: input, shape index: {}]
  %s6 = inlined_call_operand.vmem [shape: f32[8,1], index: 6, kind: input, shape index: {}]
  %s7 = inlined_call_operand.vmem [shape: f32[2,8,256], index: 7, kind: output, shape index: {}]
  %s8 = sld [smem:[#allocation0]]
  $region61: #{ffm_forward.1} parent=0
    _
  %s10 = ssub.s32 1, %s8
  %s11 = scalar_select 0, %s10, %s8
  loop: start=0, step=1, limit=4
  $region2: #{ffm_forward.1} parent=0 // loop_pre_header
    _
  $region3: #{ffm_forward.1} parent=0 // loop_header
    %s13 = sphi 0, %s17
    %p14 = scmp.ge.s32.totalorder %s13, 4
    %s23 = sphi 0, %s25
    %s26 = sphi 0, %s23
    %s27 = sphi 0, %s26
    %s43 = sphi 0, %s27
    %s47 = sphi 0, %s47
    %s49 = sphi 0, %s47
    %s50 = sphi 0, %s49
    %s64 = sphi 0, %s50
    %s68 = sphi 0, %s68
    %s70 = sphi 0, %s68
    %s71 = sphi 0, %s70
    %s85 = sphi 0, %s71
    %s89 = sphi 0, %s89
    %s91 = sphi 0, %s89
    %s92 = sphi 0, %s91
    %s106 = sphi 0, %s92
    %s110 = sphi 0, %s110
    %s112 = sphi 0, %s110
    %s113 = sphi 0, %s112
    %s127 = sphi 0, %s113
    %s131 = sphi 0, %s131
    %s133 = sphi 0, %s131
    %s134 = sphi 0, %s133
    %s148 = sphi 0, %s134
    %s152 = sphi 0, %s152
    %s154 = sphi 0, %s152
    %s155 = sphi 0, %s154
    %s169 = sphi 0, %s155
    %s175 = sphi 0, %s177
    %s178 = sphi 0, %s175
    %s179 = sphi 0, %s178
    %s195 = sphi 0, %s179
  $region4: #{ffm_forward.1} parent=0 // loop_header_branch
    %16 = sbr.rel (%p14) target = $region8
  $region5: #{ffm_forward.1} parent=0 // loop_body
    %s18 = ssub.s32 %s13, 1
    %s19 = ssub.s32 %s13, 2
    %s20 = sadd.s32 %s13, 1
    %s21 = ssub.s32 %s13, %s20
    %p22 = scmp.eq.s32.totalorder %s21, 0
    %s24 = sadd.s32 %s23, 1
    %s25 = scalar_select %p22, %s23, %s24
    %p28 = pneg %p22
    %p29 = scmp.eq.s32.totalorder %s13, 1
    %p30 = por %p28, %p29
    %p31 = scmp.ne.s32.totalorder %s23, %s26
    %p32 = scmp.eq.s32.totalorder %s13, 0
    %p33 = por %p31, %p32
    %p34 = scmp.ne.s32.totalorder %s23, %s26
    %p35 = scmp.eq.s32.totalorder %s18, 1
    %p36 = por %p34, %p35
    %p37 = scmp.ne.s32.totalorder %s26, %s27
    %p38 = scmp.eq.s32.totalorder %s18, 0
    %p39 = por %p37, %p38
    %p40 = scmp.ne.s32.totalorder %s26, %s27
    %p41 = scmp.eq.s32.totalorder %s19, 1
    %p42 = por %p40, %p41
    %p44 = scmp.ne.s32.totalorder %s27, %s43
    %p45 = scmp.eq.s32.totalorder %s19, 0
    %p46 = por %p44, %p45
    %s48 = sadd.s32 %s47, 1
    %p51 = scmp.eq.s32.totalorder %s13, 1
    %p52 = scmp.ne.s32.totalorder %s47, %s49
    %p53 = scmp.eq.s32.totalorder %s13, 0
    %p54 = por %p52, %p53
    %p55 = scmp.ne.s32.totalorder %s47, %s49
    %p56 = scmp.eq.s32.totalorder %s18, 1
    %p57 = por %p55, %p56
    %p58 = scmp.ne.s32.totalorder %s49, %s50
    %p59 = scmp.eq.s32.totalorder %s18, 0
    %p60 = por %p58, %p59
    %p61 = scmp.ne.s32.totalorder %s49, %s50
    %p62 = scmp.eq.s32.totalorder %s19, 1
    %p63 = por %p61, %p62
    %p65 = scmp.ne.s32.totalorder %s50, %s64
    %p66 = scmp.eq.s32.totalorder %s19, 0
    %p67 = por %p65, %p66
    %s69 = sadd.s32 %s68, 1
    %p72 = scmp.eq.s32.totalorder %s13, 1
    %p73 = scmp.ne.s32.totalorder %s68, %s70
    %p74 = scmp.eq.s32.totalorder %s13, 0
    %p75 = por %p73, %p74
    %p76 = scmp.ne.s32.totalorder %s68, %s70
    %p77 = scmp.eq.s32.totalorder %s18, 1
    %p78 = por %p76, %p77
    %p79 = scmp.ne.s32.totalorder %s70, %s71
    %p80 = scmp.eq.s32.totalorder %s18, 0
    %p81 = por %p79, %p80
    %p82 = scmp.ne.s32.totalorder %s70, %s71
    %p83 = scmp.eq.s32.totalorder %s19, 1
    %p84 = por %p82, %p83
    %p86 = scmp.ne.s32.totalorder %s71, %s85
    %p87 = scmp.eq.s32.totalorder %s19, 0
    %p88 = por %p86, %p87
    %s90 = sadd.s32 %s89, 1
    %p93 = scmp.eq.s32.totalorder %s13, 1
    %p94 = scmp.ne.s32.totalorder %s89, %s91
    %p95 = scmp.eq.s32.totalorder %s13, 0
    %p96 = por %p94, %p95
    %p97 = scmp.ne.s32.totalorder %s89, %s91
    %p98 = scmp.eq.s32.totalorder %s18, 1
    %p99 = por %p97, %p98
    %p100 = scmp.ne.s32.totalorder %s91, %s92
    %p101 = scmp.eq.s32.totalorder %s18, 0
    %p102 = por %p100, %p101
    %p103 = scmp.ne.s32.totalorder %s91, %s92
    %p104 = scmp.eq.s32.totalorder %s19, 1
    %p105 = por %p103, %p104
    %p107 = scmp.ne.s32.totalorder %s92, %s106
    %p108 = scmp.eq.s32.totalorder %s19, 0
    %p109 = por %p107, %p108
    %s111 = sadd.s32 %s110, 1
    %p114 = scmp.eq.s32.totalorder %s13, 1
    %p115 = scmp.ne.s32.totalorder %s110, %s112
    %p116 = scmp.eq.s32.totalorder %s13, 0
    %p117 = por %p115, %p116
    %p118 = scmp.ne.s32.totalorder %s110, %s112
    %p119 = scmp.eq.s32.totalorder %s18, 1
    %p120 = por %p118, %p119
    %p121 = scmp.ne.s32.totalorder %s112, %s113
    %p122 = scmp.eq.s32.totalorder %s18, 0
    %p123 = por %p121, %p122
    %p124 = scmp.ne.s32.totalorder %s112, %s113
    %p125 = scmp.eq.s32.totalorder %s19, 1
    %p126 = por %p124, %p125
    %p128 = scmp.ne.s32.totalorder %s113, %s127
    %p129 = scmp.eq.s32.totalorder %s19, 0
    %p130 = por %p128, %p129
    %s132 = sadd.s32 %s131, 1
    %p135 = scmp.eq.s32.totalorder %s13, 1
    %p136 = scmp.ne.s32.totalorder %s131, %s133
    %p137 = scmp.eq.s32.totalorder %s13, 0
    %p138 = por %p136, %p137
    %p139 = scmp.ne.s32.totalorder %s131, %s133
    %p140 = scmp.eq.s32.totalorder %s18, 1
    %p141 = por %p139, %p140
    %p142 = scmp.ne.s32.totalorder %s133, %s134
    %p143 = scmp.eq.s32.totalorder %s18, 0
    %p144 = por %p142, %p143
    %p145 = scmp.ne.s32.totalorder %s133, %s134
    %p146 = scmp.eq.s32.totalorder %s19, 1
    %p147 = por %p145, %p146
    %p149 = scmp.ne.s32.totalorder %s134, %s148
    %p150 = scmp.eq.s32.totalorder %s19, 0
    %p151 = por %p149, %p150
    %s153 = sadd.s32 %s152, 1
    %p156 = scmp.eq.s32.totalorder %s13, 1
    %p157 = scmp.ne.s32.totalorder %s152, %s154
    %p158 = scmp.eq.s32.totalorder %s13, 0
    %p159 = por %p157, %p158
    %p160 = scmp.ne.s32.totalorder %s152, %s154
    %p161 = scmp.eq.s32.totalorder %s18, 1
    %p162 = por %p160, %p161
    %p163 = scmp.ne.s32.totalorder %s154, %s155
    %p164 = scmp.eq.s32.totalorder %s18, 0
    %p165 = por %p163, %p164
    %p166 = scmp.ne.s32.totalorder %s154, %s155
    %p167 = scmp.eq.s32.totalorder %s19, 1
    %p168 = por %p166, %p167
    %p170 = scmp.ne.s32.totalorder %s155, %s169
    %p171 = scmp.eq.s32.totalorder %s19, 0
    %p172 = por %p170, %p171
    %s173 = ssub.s32 %s13, %s20
    %p174 = scmp.eq.s32.totalorder %s173, 0
    %s176 = sadd.s32 %s175, 1
    %s177 = scalar_select %p174, %s175, %s176
    %p180 = pneg %p174
    %p181 = scmp.eq.s32.totalorder %s13, 1
    %p182 = por %p180, %p181
    %p183 = scmp.ne.s32.totalorder %s175, %s178
    %p184 = scmp.eq.s32.totalorder %s13, 0
    %p185 = por %p183, %p184
    %p186 = scmp.ne.s32.totalorder %s175, %s178
    %p187 = scmp.eq.s32.totalorder %s18, 1
    %p188 = por %p186, %p187
    %p189 = scmp.ne.s32.totalorder %s178, %s179
    %p190 = scmp.eq.s32.totalorder %s18, 0
    %p191 = por %p189, %p190
    %p192 = scmp.ne.s32.totalorder %s178, %s179
    %p193 = scmp.eq.s32.totalorder %s19, 1
    %p194 = por %p192, %p193
    %p196 = scmp.ne.s32.totalorder %s179, %s195
    %p197 = scmp.eq.s32.totalorder %s19, 0
    %p198 = por %p196, %p197
    %p199 = scmp.le.s32.totalorder 1, %s13
    %p200 = scmp.lt.s32.totalorder %s13, 3
    %p201 = pnand %p199, %p200
    %p202 = pneg %p201
    // Predicated region
    $region9: #{ffm_forward.1} parent=5 // pred_check
      _
    $region10: #{ffm_forward.1} parent=5 // pred_check_branch
      %204 = sbr.rel (%p201) target = $region12
    $region11: #{ffm_forward.1} parent=5 // pred_region
      %s205 = ssub.s32 %s13, 1
      // Predicated region
      $region13: #{ffm_forward.1} parent=11 // pred_check
        %p206 = pneg %p60
      $region14: #{ffm_forward.1} parent=11 // pred_check_branch
        %208 = sbr.rel (%p206) target = $region16
      $region15: #{ffm_forward.1} parent=11 // pred_region
        _
      $region16: #{ffm_forward.1} parent=11 // pred_fallthru
        _
      // Predicated region
      $region17: #{ffm_forward.1} parent=11 // pred_check
        %p209 = pneg %p81
      $region18: #{ffm_forward.1} parent=11 // pred_check_branch
        %211 = sbr.rel (%p209) target = $region20
      $region19: #{ffm_forward.1} parent=11 // pred_region
        _
      $region20: #{ffm_forward.1} parent=11 // pred_fallthru
        _
      // Predicated region
      $region21: #{ffm_forward.1} parent=11 // pred_check
        %p212 = pneg %p102
      $region22: #{ffm_forward.1} parent=11 // pred_check_branch
        %214 = sbr.rel (%p212) target = $region24
      $region23: #{ffm_forward.1} parent=11 // pred_region
        _
      $region24: #{ffm_forward.1} parent=11 // pred_fallthru
        _
      // Predicated region
      $region25: #{ffm_forward.1} parent=11 // pred_check
        %p215 = pneg %p123
      $region26: #{ffm_forward.1} parent=11 // pred_check_branch
        %217 = sbr.rel (%p215) target = $region28
      $region27: #{ffm_forward.1} parent=11 // pred_region
        _
      $region28: #{ffm_forward.1} parent=11 // pred_fallthru
        _
      // Predicated region
      $region29: #{ffm_forward.1} parent=11 // pred_check
        %p218 = pneg %p144
      $region30: #{ffm_forward.1} parent=11 // pred_check_branch
        %220 = sbr.rel (%p218) target = $region32
      $region31: #{ffm_forward.1} parent=11 // pred_region
        _
      $region32: #{ffm_forward.1} parent=11 // pred_fallthru
        _
      // Predicated region
      $region33: #{ffm_forward.1} parent=11 // pred_check
        %p221 = pneg %p165
      $region34: #{ffm_forward.1} parent=11 // pred_check_branch
        %223 = sbr.rel (%p221) target = $region36
      $region35: #{ffm_forward.1} parent=11 // pred_region
        _
      $region36: #{ffm_forward.1} parent=11 // pred_fallthru
        _
    $region12: #{ffm_forward.1} parent=5 // pred_fallthru
      _
    %p224 = scmp.lt.s32.totalorder %s13, 2
    // Predicated region
    $region37: #{ffm_forward.1} parent=5 // pred_check
      %p225 = pneg %p224
    $region38: #{ffm_forward.1} parent=5 // pred_check_branch
      %227 = sbr.rel (%p225) target = $region40
    $region39: #{ffm_forward.1} parent=5 // pred_region
      // Predicated region
      $region41: #{ffm_forward.1} parent=39 // pred_check
        %p228 = pneg %p33
      $region42: #{ffm_forward.1} parent=39 // pred_check_branch
        %230 = sbr.rel (%p228) target = $region44
      $region43: #{ffm_forward.1} parent=39 // pred_region
        %p231 = scmp.lt.s32.totalorder %s13, 1
        %s232 = scalar_select %p231, %s13, 1
        %s233 = smul.addr %s232, 3
        %s234 = smul.addr %s233, 8
        %s235 = scalar_lea.vmem %s0, %s234
      $region44: #{ffm_forward.1} parent=39 // pred_fallthru
        _
    $region40: #{ffm_forward.1} parent=5 // pred_fallthru
      _
    %p236 = scmp.le.s32.totalorder 1, %s13
    %p237 = scmp.lt.s32.totalorder %s13, 3
    %p238 = pnand %p236, %p237
    %p239 = pneg %p238
    // Predicated region
    $region45: #{ffm_forward.1} parent=5 // pred_check
      _
    $region46: #{ffm_forward.1} parent=5 // pred_check_branch
      %241 = sbr.rel (%p238) target = $region48
    $region47: #{ffm_forward.1} parent=5 // pred_region
      %s242 = ssub.s32 %s13, 1
      %p243 = scmp.lt.s32.totalorder %s18, 1
      %s244 = scalar_select %p243, %s18, 1
      %s245 = smul.addr %s244, 3
      %s246 = smul.addr %s245, 8
      %s247 = scalar_lea.vmem %s0, %s246
      %p248 = pneg %p39
      %p249 = pneg %p36
      %p250 = pneg %p60
      %p251 = pneg %p57
      %p252 = pneg %p81
      %p253 = pneg %p78
      %p254 = pneg %p102
      %p255 = pneg %p99
      %p256 = pneg %p123
      %p257 = pneg %p120
      %p258 = pneg %p144
      %p259 = pneg %p141
      %p260 = pneg %p165
      %p261 = pneg %p162
      %p262 = pneg %p191
      %p263 = pneg %p188
      %p264 = scmp.lt.s32.totalorder %s18, 1
      %s265 = scalar_select %p264, %s18, 1
      %s266 = smul.addr %s265, 2
      %s267 = smul.addr %s266, 8
      %s268 = scalar_lea.vmem %s7, %s267
      %p269 = scmp.lt.s32.totalorder %s18, 1
      %s270 = scalar_select %p269, %s18, 1
      %s271 = smul.addr %s270, 3
      %s272 = smul.addr %s271, 8
      %s273 = scalar_lea.vmem %s0, %s272
      %p274 = scmp.lt.s32.totalorder %s18, 1
      %s275 = scalar_select %p274, %s18, 1
      %s276 = smul.addr %s275, 2
      %s277 = smul.addr %s276, 8
      %s278 = scalar_lea.vmem %s7, %s277
      %v279 = vlaneseq
      %v280 = vand.u32 %v279, 127
      %v281 = vadd.s32 %v280, 128
      %vm282 = vcmp.lt.s32.totalorder %v280, 0
      %v283 = vsub.s32 0, %v280
      %v284 = vsel %vm282, %v283, %v280
      %v285 = vshrl.u32 %v284, 4
      %v286 = vand.u32 %v284, 15
      %v287 = vsub.s32 0, %v286
      %v288 = vsel %vm282, %v287, %v286
      %vm289 = vcmp.lt.s32.totalorder %v281, 0
      %v290 = vsub.s32 0, %v281
      %v291 = vsel %vm289, %v290, %v281
      %v292 = vshrl.u32 %v291, 4
      %v293 = vand.u32 %v291, 15
      %v294 = vsub.s32 0, %v293
      %v295 = vsel %vm289, %v294, %v293
      %vm296 = vcmp.ne.s32.totalorder %v288, 0
      %vm297 = vcmp.ne.s32.totalorder %v295, 0
      %vm298 = vcmp.lt.s32.totalorder %v288, 0
      %vm299 = vcmp.lt.s32.totalorder %v295, 0
      %vm300 = vmand %vm298, %vm296
      %vm301 = vmand %vm299, %vm297
      %v302 = vadd.s32 %v288, 16
      %v303 = vadd.s32 %v295, 16
      %v304 = vsel %vm300, %v302, %v288
      %v305 = vsel %vm301, %v303, %v295
      %v306 = vld [vmem:[%s273] sm:$0xff]
      %v307 = vld [vmem:[%s273 + $0x8] sm:$0xff]
      %vm308 = vcmp.ne.s32.totalorder %v304, 0
      %vm309 = vcmp.ne.s32.totalorder %v305, 0
      %v310 = vsel %vm308, 1, 0
      %v311 = vsel %vm309, 1, 0
      %vm312 = vcmp.eq.s32.totalorder %v310, 1
      %vm313 = vcmp.eq.s32.totalorder %v311, 1
      %v314 = vsel %vm312, %v306, 0.0
      %v315 = vsel %vm313, %v307, 0.0
      %v316 = vld [vmem:[%s1] sm:$0xff]
      %v317 = vld [vmem:[%s273] sm:$0xff]
      %v318 = vld [vmem:[%s273 + $0x8] sm:$0xff]
      %v319 = vld [vmem:[%s273 + $0x10] sm:$0xff]
      %s320 = scalar_lea.vmem %s1, 8
      %v321 = vld [vmem:[%s320] sm:$0xff]
      %325 = vrot.lane.b32.xlu0 %v317, 127
      %v326 = vpop.permute.xlu0 %325
      %327 = vrot.lane.b32.xlu0 %v318, 127
      %v328 = vpop.permute.xlu0 %327
      %329 = vrot.lane.b32.xlu0 %v319, 127
      %v330 = vpop.permute.xlu0 %329
      %vm331 = vcmask 1039360
      %v332 = vsel %vm331, %v326, %v328
      %v333 = vsel %vm331, %v328, %v330
      %vm336 = vcmask 64512
      %v338 = vsel %vm336, %v321, 0
      %340 = vmatpush.msra.mxu0 0.0
      %341 = vmatpush.msra.mxu0 0.0
      %342 = vmatpush.msra.mxu0 0.0
      %343 = vmatpush.msra.mxu0 0.0
      %344 = vmatpush.msra.mxu0 0.0
      %345 = vmatpush.msra.mxu0 0.0
      %346 = vmatpush.msra.mxu0 0.0
      %347 = vmatpush.msra.mxu0 0.0
      %348 = vmatpush.msra.mxu0 0.0
      %349 = vmatpush.msra.mxu0 0.0
      %350 = vmatpush.msra.mxu0 0.0
      %351 = vmatpush.msra.mxu0 0.0
      %352 = vmatpush.msra.mxu0 0.0
      %353 = vmatpush.msra.mxu0 0.0
      %354 = vmatpush.msra.mxu0 0.0
      %355 = vmatpush.msra.mxu0 %v332
      %356 = vmatmul.f32.gmra.mxu0 %v338
      %v357 = vpop.f32.mrf.mxu0
      %v358 = vadd.f32 0.0, %v357
      %359 = vdwg.mxu0
      %360 = vmatpush.msra.mxu0 0.0
      %361 = vmatpush.msra.mxu0 0.0
      %362 = vmatpush.msra.mxu0 0.0
      %363 = vmatpush.msra.mxu0 0.0
      %364 = vmatpush.msra.mxu0 0.0
      %365 = vmatpush.msra.mxu0 0.0
      %366 = vmatpush.msra.mxu0 0.0
      %367 = vmatpush.msra.mxu0 0.0
      %368 = vmatpush.msra.mxu0 0.0
      %369 = vmatpush.msra.mxu0 0.0
      %370 = vmatpush.msra.mxu0 0.0
      %371 = vmatpush.msra.mxu0 0.0
      %372 = vmatpush.msra.mxu0 0.0
      %373 = vmatpush.msra.mxu0 0.0
      %374 = vmatpush.msra.mxu0 0.0
      %375 = vmatpush.msra.mxu0 %v333
      %376 = vmatmul.f32.gmra.mxu0 %v338
      %v377 = vpop.f32.mrf.mxu0
      %v378 = vadd.f32 0.0, %v377
      %379 = vdwg.mxu0
      %v381 = vsel %vm336, %v316, 0
      %383 = vmatpush.msra.mxu0 0.0
      %384 = vmatpush.msra.mxu0 0.0
      %385 = vmatpush.msra.mxu0 0.0
      %386 = vmatpush.msra.mxu0 0.0
      %387 = vmatpush.msra.mxu0 0.0
      %388 = vmatpush.msra.mxu0 0.0
      %389 = vmatpush.msra.mxu0 0.0
      %390 = vmatpush.msra.mxu0 0.0
      %391 = vmatpush.msra.mxu0 0.0
      %392 = vmatpush.msra.mxu0 0.0
      %393 = vmatpush.msra.mxu0 0.0
      %394 = vmatpush.msra.mxu0 0.0
      %395 = vmatpush.msra.mxu0 0.0
      %396 = vmatpush.msra.mxu0 0.0
      %397 = vmatpush.msra.mxu0 0.0
      %398 = vmatpush.msra.mxu0 %v314
      %399 = vmatmul.f32.gmra.mxu0 %v381
      %v400 = vpop.f32.mrf.mxu0
      %v401 = vadd.f32 %v358, %v400
      %402 = vdwg.mxu0
      %403 = vmatpush.msra.mxu0 0.0
      %404 = vmatpush.msra.mxu0 0.0
      %405 = vmatpush.msra.mxu0 0.0
      %406 = vmatpush.msra.mxu0 0.0
      %407 = vmatpush.msra.mxu0 0.0
      %408 = vmatpush.msra.mxu0 0.0
      %409 = vmatpush.msra.mxu0 0.0
      %410 = vmatpush.msra.mxu0 0.0
      %411 = vmatpush.msra.mxu0 0.0
      %412 = vmatpush.msra.mxu0 0.0
      %413 = vmatpush.msra.mxu0 0.0
      %414 = vmatpush.msra.mxu0 0.0
      %415 = vmatpush.msra.mxu0 0.0
      %416 = vmatpush.msra.mxu0 0.0
      %417 = vmatpush.msra.mxu0 0.0
      %418 = vmatpush.msra.mxu0 %v315
      %419 = vmatmul.f32.gmra.mxu0 %v381
      %v420 = vpop.f32.mrf.mxu0
      %v421 = vadd.f32 %v378, %v420
      %422 = vdwg.mxu0
      %vm423 = vcmp.ne.s32.totalorder %v304, 15
      %vm424 = vcmp.ne.s32.totalorder %v305, 15
      %v425 = vsel %vm423, 1, 0
      %v426 = vsel %vm424, 1, 0
      %vm427 = vcmp.eq.s32.totalorder %v425, 1
      %vm428 = vcmp.eq.s32.totalorder %v426, 1
      %429 = vrot.lane.b32.xlu0 %v317, 126
      %v430 = vpop.permute.xlu0 %429
      %431 = vrot.lane.b32.xlu0 %v318, 126
      %v432 = vpop.permute.xlu0 %431
      %433 = vrot.lane.b32.xlu0 %v319, 126
      %v434 = vpop.permute.xlu0 %433
      %vm435 = vcmask 1031168
      %v436 = vsel %vm435, %v430, %v432
      %v437 = vsel %vm435, %v432, %v434
      %v440 = vsel %vm427, %v436, 0.0
      %v441 = vsel %vm428, %v437, 0.0
      %s442 = scalar_lea.vmem %s1, 16
      %v443 = vld [vmem:[%s442] sm:$0xff]
      %v445 = vsel %vm336, %v443, 0
      %447 = vmatpush.msra.mxu0 0.0
      %448 = vmatpush.msra.mxu0 0.0
      %449 = vmatpush.msra.mxu0 0.0
      %450 = vmatpush.msra.mxu0 0.0
      %451 = vmatpush.msra.mxu0 0.0
      %452 = vmatpush.msra.mxu0 0.0
      %453 = vmatpush.msra.mxu0 0.0
      %454 = vmatpush.msra.mxu0 0.0
      %455 = vmatpush.msra.mxu0 0.0
      %456 = vmatpush.msra.mxu0 0.0
      %457 = vmatpush.msra.mxu0 0.0
      %458 = vmatpush.msra.mxu0 0.0
      %459 = vmatpush.msra.mxu0 0.0
      %460 = vmatpush.msra.mxu0 0.0
      %461 = vmatpush.msra.mxu0 0.0
      %462 = vmatpush.msra.mxu0 %v440
      %463 = vmatmul.f32.gmra.mxu0 %v445
      %v464 = vpop.f32.mrf.mxu0
      %v465 = vadd.f32 0.0, %v464
      %466 = vdwg.mxu0
      %467 = vmatpush.msra.mxu0 0.0
      %468 = vmatpush.msra.mxu0 0.0
      %469 = vmatpush.msra.mxu0 0.0
      %470 = vmatpush.msra.mxu0 0.0
      %471 = vmatpush.msra.mxu0 0.0
      %472 = vmatpush.msra.mxu0 0.0
      %473 = vmatpush.msra.mxu0 0.0
      %474 = vmatpush.msra.mxu0 0.0
      %475 = vmatpush.msra.mxu0 0.0
      %476 = vmatpush.msra.mxu0 0.0
      %477 = vmatpush.msra.mxu0 0.0
      %478 = vmatpush.msra.mxu0 0.0
      %479 = vmatpush.msra.mxu0 0.0
      %480 = vmatpush.msra.mxu0 0.0
      %481 = vmatpush.msra.mxu0 0.0
      %482 = vmatpush.msra.mxu0 %v441
      %483 = vmatmul.f32.gmra.mxu0 %v445
      %v484 = vpop.f32.mrf.mxu0
      %v485 = vadd.f32 0.0, %v484
      %486 = vdwg.mxu0
      %v487 = vadd.f32 %v401, %v465
      %v488 = vadd.f32 %v421, %v485
      %489 = vrot.lane.b32.xlu0 %v317, 112
      %v490 = vpop.permute.xlu0 %489
      %491 = vrot.lane.b32.xlu0 %v318, 112
      %v492 = vpop.permute.xlu0 %491
      %493 = vrot.lane.b32.xlu0 %v319, 112
      %v494 = vpop.permute.xlu0 %493
      %vm495 = vcmask 916480
      %v496 = vsel %vm495, %v490, %v492
      %v497 = vsel %vm495, %v492, %v494
      %v500 = vsel %vm312, %v496, 0.0
      %v501 = vsel %vm313, %v497, 0.0
      %s502 = scalar_lea.vmem %s1, 24
      %v503 = vld [vmem:[%s502] sm:$0xff]
      %v505 = vsel %vm336, %v503, 0
      %507 = vmatpush.msra.mxu0 0.0
      %508 = vmatpush.msra.mxu0 0.0
      %509 = vmatpush.msra.mxu0 0.0
      %510 = vmatpush.msra.mxu0 0.0
      %511 = vmatpush.msra.mxu0 0.0
      %512 = vmatpush.msra.mxu0 0.0
      %513 = vmatpush.msra.mxu0 0.0
      %514 = vmatpush.msra.mxu0 0.0
      %515 = vmatpush.msra.mxu0 0.0
      %516 = vmatpush.msra.mxu0 0.0
      %517 = vmatpush.msra.mxu0 0.0
      %518 = vmatpush.msra.mxu0 0.0
      %519 = vmatpush.msra.mxu0 0.0
      %520 = vmatpush.msra.mxu0 0.0
      %521 = vmatpush.msra.mxu0 0.0
      %522 = vmatpush.msra.mxu0 %v500
      %523 = vmatmul.f32.gmra.mxu0 %v505
      %v524 = vpop.f32.mrf.mxu0
      %v525 = vadd.f32 0.0, %v524
      %526 = vdwg.mxu0
      %527 = vmatpush.msra.mxu0 0.0
      %528 = vmatpush.msra.mxu0 0.0
      %529 = vmatpush.msra.mxu0 0.0
      %530 = vmatpush.msra.mxu0 0.0
      %531 = vmatpush.msra.mxu0 0.0
      %532 = vmatpush.msra.mxu0 0.0
      %533 = vmatpush.msra.mxu0 0.0
      %534 = vmatpush.msra.mxu0 0.0
      %535 = vmatpush.msra.mxu0 0.0
      %536 = vmatpush.msra.mxu0 0.0
      %537 = vmatpush.msra.mxu0 0.0
      %538 = vmatpush.msra.mxu0 0.0
      %539 = vmatpush.msra.mxu0 0.0
      %540 = vmatpush.msra.mxu0 0.0
      %541 = vmatpush.msra.mxu0 0.0
      %542 = vmatpush.msra.mxu0 %v501
      %543 = vmatmul.f32.gmra.mxu0 %v505
      %v544 = vpop.f32.mrf.mxu0
      %v545 = vadd.f32 0.0, %v544
      %546 = vdwg.mxu0
      %v547 = vadd.f32 %v487, %v525
      %v548 = vadd.f32 %v488, %v545
      %s549 = scalar_lea.vmem %s1, 32
      %v550 = vld [vmem:[%s549] sm:$0xff]
      %551 = vrot.lane.b32.xlu0 %v317, 111
      %v552 = vpop.permute.xlu0 %551
      %553 = vrot.lane.b32.xlu0 %v318, 111
      %v554 = vpop.permute.xlu0 %553
      %555 = vrot.lane.b32.xlu0 %v319, 111
      %v556 = vpop.permute.xlu0 %555
      %vm557 = vcmask 908288
      %v558 = vsel %vm557, %v552, %v554
      %v559 = vsel %vm557, %v554, %v556
      %v563 = vsel %vm336, %v550, 0
      %565 = vmatpush.msra.mxu0 0.0
      %566 = vmatpush.msra.mxu0 0.0
      %567 = vmatpush.msra.mxu0 0.0
      %568 = vmatpush.msra.mxu0 0.0
      %569 = vmatpush.msra.mxu0 0.0
      %570 = vmatpush.msra.mxu0 0.0
      %571 = vmatpush.msra.mxu0 0.0
      %572 = vmatpush.msra.mxu0 0.0
      %573 = vmatpush.msra.mxu0 0.0
      %574 = vmatpush.msra.mxu0 0.0
      %575 = vmatpush.msra.mxu0 0.0
      %576 = vmatpush.msra.mxu0 0.0
      %577 = vmatpush.msra.mxu0 0.0
      %578 = vmatpush.msra.mxu0 0.0
      %579 = vmatpush.msra.mxu0 0.0
      %580 = vmatpush.msra.mxu0 %v558
      %581 = vmatmul.f32.gmra.mxu0 %v563
      %v582 = vpop.f32.mrf.mxu0
      %v583 = vadd.f32 0.0, %v582
      %584 = vdwg.mxu0
      %585 = vmatpush.msra.mxu0 0.0
      %586 = vmatpush.msra.mxu0 0.0
      %587 = vmatpush.msra.mxu0 0.0
      %588 = vmatpush.msra.mxu0 0.0
      %589 = vmatpush.msra.mxu0 0.0
      %590 = vmatpush.msra.mxu0 0.0
      %591 = vmatpush.msra.mxu0 0.0
      %592 = vmatpush.msra.mxu0 0.0
      %593 = vmatpush.msra.mxu0 0.0
      %594 = vmatpush.msra.mxu0 0.0
      %595 = vmatpush.msra.mxu0 0.0
      %596 = vmatpush.msra.mxu0 0.0
      %597 = vmatpush.msra.mxu0 0.0
      %598 = vmatpush.msra.mxu0 0.0
      %599 = vmatpush.msra.mxu0 0.0
      %600 = vmatpush.msra.mxu0 %v559
      %601 = vmatmul.f32.gmra.mxu0 %v563
      %v602 = vpop.f32.mrf.mxu0
      %v603 = vadd.f32 0.0, %v602
      %604 = vdwg.mxu0
      %v605 = vadd.f32 %v547, %v583
      %v606 = vadd.f32 %v548, %v603
      %607 = vrot.lane.b32.xlu0 %v317, 110
      %v608 = vpop.permute.xlu0 %607
      %609 = vrot.lane.b32.xlu0 %v318, 110
      %v610 = vpop.permute.xlu0 %609
      %611 = vrot.lane.b32.xlu0 %v319, 110
      %v612 = vpop.permute.xlu0 %611
      %vm613 = vcmask 900096
      %v614 = vsel %vm613, %v608, %v610
      %v615 = vsel %vm613, %v610, %v612
      %v618 = vsel %vm427, %v614, 0.0
      %v619 = vsel %vm428, %v615, 0.0
      %s620 = scalar_lea.vmem %s1, 40
      %v621 = vld [vmem:[%s620] sm:$0xff]
      %v623 = vsel %vm336, %v621, 0
      %625 = vmatpush.msra.mxu0 0.0
      %626 = vmatpush.msra.mxu0 0.0
      %627 = vmatpush.msra.mxu0 0.0
      %628 = vmatpush.msra.mxu0 0.0
      %629 = vmatpush.msra.mxu0 0.0
      %630 = vmatpush.msra.mxu0 0.0
      %631 = vmatpush.msra.mxu0 0.0
      %632 = vmatpush.msra.mxu0 0.0
      %633 = vmatpush.msra.mxu0 0.0
      %634 = vmatpush.msra.mxu0 0.0
      %635 = vmatpush.msra.mxu0 0.0
      %636 = vmatpush.msra.mxu0 0.0
      %637 = vmatpush.msra.mxu0 0.0
      %638 = vmatpush.msra.mxu0 0.0
      %639 = vmatpush.msra.mxu0 0.0
      %640 = vmatpush.msra.mxu0 %v618
      %641 = vmatmul.f32.gmra.mxu0 %v623
      %v642 = vpop.f32.mrf.mxu0
      %v643 = vadd.f32 0.0, %v642
      %644 = vdwg.mxu0
      %645 = vmatpush.msra.mxu0 0.0
      %646 = vmatpush.msra.mxu0 0.0
      %647 = vmatpush.msra.mxu0 0.0
      %648 = vmatpush.msra.mxu0 0.0
      %649 = vmatpush.msra.mxu0 0.0
      %650 = vmatpush.msra.mxu0 0.0
      %651 = vmatpush.msra.mxu0 0.0
      %652 = vmatpush.msra.mxu0 0.0
      %653 = vmatpush.msra.mxu0 0.0
      %654 = vmatpush.msra.mxu0 0.0
      %655 = vmatpush.msra.mxu0 0.0
      %656 = vmatpush.msra.mxu0 0.0
      %657 = vmatpush.msra.mxu0 0.0
      %658 = vmatpush.msra.mxu0 0.0
      %659 = vmatpush.msra.mxu0 0.0
      %660 = vmatpush.msra.mxu0 %v619
      %661 = vmatmul.f32.gmra.mxu0 %v623
      %v662 = vpop.f32.mrf.mxu0
      %v663 = vadd.f32 0.0, %v662
      %664 = vdwg.mxu0
      %v665 = vadd.f32 %v605, %v643
      %v666 = vadd.f32 %v606, %v663
      %667 = vrot.lane.b32.xlu0 %v317, 96
      %v668 = vpop.permute.xlu0 %667
      %669 = vrot.lane.b32.xlu0 %v318, 96
      %v670 = vpop.permute.xlu0 %669
      %671 = vrot.lane.b32.xlu0 %v319, 96
      %v672 = vpop.permute.xlu0 %671
      %vm673 = vcmask 785408
      %v674 = vsel %vm673, %v668, %v670
      %v675 = vsel %vm673, %v670, %v672
      %v678 = vsel %vm312, %v674, 0.0
      %v679 = vsel %vm313, %v675, 0.0
      %s680 = scalar_lea.vmem %s1, 48
      %v681 = vld [vmem:[%s680] sm:$0xff]
      %v683 = vsel %vm336, %v681, 0
      %685 = vmatpush.msra.mxu0 0.0
      %686 = vmatpush.msra.mxu0 0.0
      %687 = vmatpush.msra.mxu0 0.0
      %688 = vmatpush.msra.mxu0 0.0
      %689 = vmatpush.msra.mxu0 0.0
      %690 = vmatpush.msra.mxu0 0.0
      %691 = vmatpush.msra.mxu0 0.0
      %692 = vmatpush.msra.mxu0 0.0
      %693 = vmatpush.msra.mxu0 0.0
      %694 = vmatpush.msra.mxu0 0.0
      %695 = vmatpush.msra.mxu0 0.0
      %696 = vmatpush.msra.mxu0 0.0
      %697 = vmatpush.msra.mxu0 0.0
      %698 = vmatpush.msra.mxu0 0.0
      %699 = vmatpush.msra.mxu0 0.0
      %700 = vmatpush.msra.mxu0 %v678
      %701 = vmatmul.f32.gmra.mxu0 %v683
      %v702 = vpop.f32.mrf.mxu0
      %v703 = vadd.f32 0.0, %v702
      %704 = vdwg.mxu0
      %705 = vmatpush.msra.mxu0 0.0
      %706 = vmatpush.msra.mxu0 0.0
      %707 = vmatpush.msra.mxu0 0.0
      %708 = vmatpush.msra.mxu0 0.0
      %709 = vmatpush.msra.mxu0 0.0
      %710 = vmatpush.msra.mxu0 0.0
      %711 = vmatpush.msra.mxu0 0.0
      %712 = vmatpush.msra.mxu0 0.0
      %713 = vmatpush.msra.mxu0 0.0
      %714 = vmatpush.msra.mxu0 0.0
      %715 = vmatpush.msra.mxu0 0.0
      %716 = vmatpush.msra.mxu0 0.0
      %717 = vmatpush.msra.mxu0 0.0
      %718 = vmatpush.msra.mxu0 0.0
      %719 = vmatpush.msra.mxu0 0.0
      %720 = vmatpush.msra.mxu0 %v679
      %721 = vmatmul.f32.gmra.mxu0 %v683
      %v722 = vpop.f32.mrf.mxu0
      %v723 = vadd.f32 0.0, %v722
      %724 = vdwg.mxu0
      %v725 = vadd.f32 %v665, %v703
      %v726 = vadd.f32 %v666, %v723
      %s727 = scalar_lea.vmem %s1, 56
      %v728 = vld [vmem:[%s727] sm:$0xff]
      %729 = vrot.lane.b32.xlu0 %v317, 95
      %v730 = vpop.permute.xlu0 %729
      %731 = vrot.lane.b32.xlu0 %v318, 95
      %v732 = vpop.permute.xlu0 %731
      %733 = vrot.lane.b32.xlu0 %v319, 95
      %v734 = vpop.permute.xlu0 %733
      %vm735 = vcmask 777216
      %v736 = vsel %vm735, %v730, %v732
      %v737 = vsel %vm735, %v732, %v734
      %v741 = vsel %vm336, %v728, 0
      %743 = vmatpush.msra.mxu0 0.0
      %744 = vmatpush.msra.mxu0 0.0
      %745 = vmatpush.msra.mxu0 0.0
      %746 = vmatpush.msra.mxu0 0.0
      %747 = vmatpush.msra.mxu0 0.0
      %748 = vmatpush.msra.mxu0 0.0
      %749 = vmatpush.msra.mxu0 0.0
      %750 = vmatpush.msra.mxu0 0.0
      %751 = vmatpush.msra.mxu0 0.0
      %752 = vmatpush.msra.mxu0 0.0
      %753 = vmatpush.msra.mxu0 0.0
      %754 = vmatpush.msra.mxu0 0.0
      %755 = vmatpush.msra.mxu0 0.0
      %756 = vmatpush.msra.mxu0 0.0
      %757 = vmatpush.msra.mxu0 0.0
      %758 = vmatpush.msra.mxu0 %v736
      %759 = vmatmul.f32.gmra.mxu0 %v741
      %v760 = vpop.f32.mrf.mxu0
      %v761 = vadd.f32 0.0, %v760
      %762 = vdwg.mxu0
      %763 = vmatpush.msra.mxu0 0.0
      %764 = vmatpush.msra.mxu0 0.0
      %765 = vmatpush.msra.mxu0 0.0
      %766 = vmatpush.msra.mxu0 0.0
      %767 = vmatpush.msra.mxu0 0.0
      %768 = vmatpush.msra.mxu0 0.0
      %769 = vmatpush.msra.mxu0 0.0
      %770 = vmatpush.msra.mxu0 0.0
      %771 = vmatpush.msra.mxu0 0.0
      %772 = vmatpush.msra.mxu0 0.0
      %773 = vmatpush.msra.mxu0 0.0
      %774 = vmatpush.msra.mxu0 0.0
      %775 = vmatpush.msra.mxu0 0.0
      %776 = vmatpush.msra.mxu0 0.0
      %777 = vmatpush.msra.mxu0 0.0
      %778 = vmatpush.msra.mxu0 %v737
      %779 = vmatmul.f32.gmra.mxu0 %v741
      %v780 = vpop.f32.mrf.mxu0
      %v781 = vadd.f32 0.0, %v780
      %782 = vdwg.mxu0
      %v783 = vadd.f32 %v725, %v761
      %v784 = vadd.f32 %v726, %v781
      %785 = vrot.lane.b32.xlu0 %v317, 94
      %v786 = vpop.permute.xlu0 %785
      %787 = vrot.lane.b32.xlu0 %v318, 94
      %v788 = vpop.permute.xlu0 %787
      %789 = vrot.lane.b32.xlu0 %v319, 94
      %v790 = vpop.permute.xlu0 %789
      %vm791 = vcmask 769024
      %v792 = vsel %vm791, %v786, %v788
      %v793 = vsel %vm791, %v788, %v790
      %v796 = vsel %vm427, %v792, 0.0
      %v797 = vsel %vm428, %v793, 0.0
      %s798 = scalar_lea.vmem %s1, 64
      %v799 = vld [vmem:[%s798] sm:$0xff]
      %v801 = vsel %vm336, %v799, 0
      %803 = vmatpush.msra.mxu0 0.0
      %804 = vmatpush.msra.mxu0 0.0
      %805 = vmatpush.msra.mxu0 0.0
      %806 = vmatpush.msra.mxu0 0.0
      %807 = vmatpush.msra.mxu0 0.0
      %808 = vmatpush.msra.mxu0 0.0
      %809 = vmatpush.msra.mxu0 0.0
      %810 = vmatpush.msra.mxu0 0.0
      %811 = vmatpush.msra.mxu0 0.0
      %812 = vmatpush.msra.mxu0 0.0
      %813 = vmatpush.msra.mxu0 0.0
      %814 = vmatpush.msra.mxu0 0.0
      %815 = vmatpush.msra.mxu0 0.0
      %816 = vmatpush.msra.mxu0 0.0
      %817 = vmatpush.msra.mxu0 0.0
      %818 = vmatpush.msra.mxu0 %v796
      %819 = vmatmul.f32.gmra.mxu0 %v801
      %v820 = vpop.f32.mrf.mxu0
      %v821 = vadd.f32 0.0, %v820
      %822 = vdwg.mxu0
      %823 = vmatpush.msra.mxu0 0.0
      %824 = vmatpush.msra.mxu0 0.0
      %825 = vmatpush.msra.mxu0 0.0
      %826 = vmatpush.msra.mxu0 0.0
      %827 = vmatpush.msra.mxu0 0.0
      %828 = vmatpush.msra.mxu0 0.0
      %829 = vmatpush.msra.mxu0 0.0
      %830 = vmatpush.msra.mxu0 0.0
      %831 = vmatpush.msra.mxu0 0.0
      %832 = vmatpush.msra.mxu0 0.0
      %833 = vmatpush.msra.mxu0 0.0
      %834 = vmatpush.msra.mxu0 0.0
      %835 = vmatpush.msra.mxu0 0.0
      %836 = vmatpush.msra.mxu0 0.0
      %837 = vmatpush.msra.mxu0 0.0
      %838 = vmatpush.msra.mxu0 %v797
      %839 = vmatmul.f32.gmra.mxu0 %v801
      %v840 = vpop.f32.mrf.mxu0
      %v841 = vadd.f32 0.0, %v840
      %842 = vdwg.mxu0
      %v843 = vadd.f32 %v783, %v821
      %v844 = vadd.f32 %v784, %v841
      %v845 = vld [vmem:[%s2] sm:$0xff]
      %847 = vset.pattern.permute.xlu0 0
      %848 = vperm.xlu0 %847, %v845
      %v849 = vpop.permute.xlu0 %848
      %v851 = vadd.f32 %v843, %v849
      %v852 = vadd.f32 %v844, %v849
      %v853 = vmax.f32 %v851, 0.0
      %v854 = vmax.f32 %v852, 0.0
      %v855 = vadd.f32 %v853, %v854
      %856 = vadd.xlane.f32.xlu0 %v855
      %v857 = vpop.xlane.xlu0 %856
      %v858 = vmul.f32 %v857, 0.00390625
      %v859 = vld [vmem:[%s3] sm:$0xff]
      %v860 = vld [vmem:[%s4] sm:$0xff]
      %862 = vset.pattern.permute.xlu0 0
      %863 = vperm.xlu0 %862, %v860
      %v864 = vpop.permute.xlu0 %863
      %v867 = vsel %vm336, %v859, 0
      %869 = vmatpush.msra.mxu0 0.0
      %870 = vmatpush.msra.mxu0 0.0
      %871 = vmatpush.msra.mxu0 0.0
      %872 = vmatpush.msra.mxu0 0.0
      %873 = vmatpush.msra.mxu0 0.0
      %874 = vmatpush.msra.mxu0 0.0
      %875 = vmatpush.msra.mxu0 0.0
      %876 = vmatpush.msra.mxu0 0.0
      %877 = vmatpush.msra.mxu0 0.0
      %878 = vmatpush.msra.mxu0 0.0
      %879 = vmatpush.msra.mxu0 0.0
      %880 = vmatpush.msra.mxu0 0.0
      %881 = vmatpush.msra.mxu0 0.0
      %882 = vmatpush.msra.mxu0 0.0
      %883 = vmatpush.msra.mxu0 0.0
      %884 = vmatpush.msra.mxu0 %v858
      %885 = vmatmul.f32.gmra.mxu0 %v867
      %v886 = vpop.f32.mrf.mxu0
      %v887 = vadd.f32 %v864, %v886
      %888 = vdwg.mxu0
      %v889 = vmax.f32 %v887, 0.0
      %v890 = vld [vmem:[%s5] sm:$0xff]
      %v891 = vld [vmem:[%s6] sm:$0xff]
      %893 = vset.pattern.permute.xlu0 0
      %894 = vperm.xlu0 %893, %v891
      %v895 = vpop.permute.xlu0 %894
      %v898 = vsel %vm336, %v890, 0
      %900 = vmatpush.msra.mxu0 0.0
      %901 = vmatpush.msra.mxu0 0.0
      %902 = vmatpush.msra.mxu0 0.0
      %903 = vmatpush.msra.mxu0 0.0
      %904 = vmatpush.msra.mxu0 0.0
      %905 = vmatpush.msra.mxu0 0.0
      %906 = vmatpush.msra.mxu0 0.0
      %907 = vmatpush.msra.mxu0 0.0
      %908 = vmatpush.msra.mxu0 0.0
      %909 = vmatpush.msra.mxu0 0.0
      %910 = vmatpush.msra.mxu0 0.0
      %911 = vmatpush.msra.mxu0 0.0
      %912 = vmatpush.msra.mxu0 0.0
      %913 = vmatpush.msra.mxu0 0.0
      %914 = vmatpush.msra.mxu0 0.0
      %915 = vmatpush.msra.mxu0 %v889
      %916 = vmatmul.f32.gmra.mxu0 %v898
      %v917 = vpop.f32.mrf.mxu0
      %v918 = vadd.f32 %v895, %v917
      %919 = vdwg.mxu0
      %v920 = vsub.f32 0.0, %v918
      %v921 = vmul.f32 %v920, 1.442695
      %v922 = vpow.pop %v921
      %v923 = vadd.f32 %v922, 1.0
      %v924 = vrcp.pop %v923
      %v925 = vmul.f32 %v923, %v924
      %v926 = vsub.f32 1.0, %v925
      %v927 = vmul.f32 %v924, %v926
      %v928 = vadd.f32 %v924, %v927
      %vm929 = vweird.f32 %v923
      %vm930 = vweird.f32 %v924
      %vm931 = vmor %vm929, %vm930
      %v932 = vsel %vm931, %v924, %v928
      %v933 = vand.u32 2147483647, %v923
      %vm934 = vcmp.eq.f32.partialorder %v933, 8.507059e+37
      %v935 = vand.u32 %v923, 2147483648
      %v936 = vor.u32 1.1754944e-38, %v935
      %v937 = vsel %vm934, %v936, %v932
      %v938 = vmul.f32 1.0, %v937
      %v939 = vadd.f32 %v938, 1.0
      %941 = vset.pattern.permute.xlu0 0
      %942 = vperm.xlu0 %941, %v939
      %v943 = vpop.permute.xlu0 %942
      %v945 = vmul.f32 %v853, %v943
      %v946 = vmul.f32 %v854, %v943
      %947 = vst [vmem:[%s278] sm:$0xff] %v945
      %948 = vst [vmem:[%s278 + $0x8] sm:$0xff] %v946
      %p949 = scmp.lt.s32.totalorder %s18, 1
      %s950 = scalar_select %p949, %s18, 1
      %s951 = smul.addr %s950, 2
      %s952 = smul.addr %s951, 8
      %s953 = scalar_lea.vmem %s7, %s952
      // Predicated region
      $region49: #{ffm_forward.1} parent=47 // pred_check
        %p954 = pneg %p188
      $region50: #{ffm_forward.1} parent=47 // pred_check_branch
        %956 = sbr.rel (%p954) target = $region52
      $region51: #{ffm_forward.1} parent=47 // pred_region
        _
      $region52: #{ffm_forward.1} parent=47 // pred_fallthru
        _
    $region48: #{ffm_forward.1} parent=5 // pred_fallthru
      _
    %p957 = scmp.le.s32.totalorder 2, %s13
    // Predicated region
    $region53: #{ffm_forward.1} parent=5 // pred_check
      %p958 = pneg %p957
    $region54: #{ffm_forward.1} parent=5 // pred_check_branch
      %960 = sbr.rel (%p958) target = $region56
    $region55: #{ffm_forward.1} parent=5 // pred_region
      %s961 = ssub.s32 %s13, 2
      // Predicated region
      $region57: #{ffm_forward.1} parent=55 // pred_check
        %p962 = pneg %p194
      $region58: #{ffm_forward.1} parent=55 // pred_check_branch
        %964 = sbr.rel (%p962) target = $region60
      $region59: #{ffm_forward.1} parent=55 // pred_region
        %p965 = scmp.lt.s32.totalorder %s19, 1
        %s966 = scalar_select %p965, %s19, 1
        %s967 = smul.addr %s966, 2
        %s968 = smul.addr %s967, 8
        %s969 = scalar_lea.vmem %s7, %s968
      $region60: #{ffm_forward.1} parent=55 // pred_fallthru
        _
    $region56: #{ffm_forward.1} parent=5 // pred_fallthru
      _
  $region6: #{ffm_forward.1} parent=0 // loop_footer
    %s17 = sadd.s32 1, %s13
  $region7: #{ffm_forward.1} parent=0 // loop_footer_branch
    %12 = sbr.rel target = $region3
  $region8: #{ffm_forward.1} parent=0 // loop_exit
    _

</llo_original>
